<compile_context>
chip_gen: v7x
topology: tpu7x:2x2x1
jax: 0.10.0
libtpu: 0.0.40
codegen_flags: <defaults>
</compile_context>

<pallas_src>
import functools

import jax
import jax.numpy as jnp
from jax import lax
from jax.experimental import pallas as pl
from jax.experimental.pallas import tpu as pltpu


def _hardswish(v):
    # PyTorch nn.Hardswish: x * relu6(x + 3) / 6
    return v * jnp.clip(v + 3.0, 0.0, 6.0) * (1.0 / 6.0)


def _hardsigmoid(v):
    # PyTorch nn.Hardsigmoid: relu6(x + 3) / 6
    return jnp.clip(v + 3.0, 0.0, 6.0) * (1.0 / 6.0)


def _se_block_kernel(x_ref, w1t_ref, b1_ref, w2t_ref, b2_ref, o_ref,
                     *, inv_hw, hw, mask_tail):
    # Per grid step (Bblk batch elements):
    #   x_ref/o_ref: (Bblk, C, HW)   w1t_ref: (C, R)   b1_ref: (1, R)
    #   w2t_ref: (R, C)              b2_ref: (1, C)
    x = x_ref[...]                                   # native dtype

    # Squeeze: f32-accumulated global average pool over the spatial axis.
    # When HW is not a multiple of 128, mask the physical padding lanes of the
    # VMEM tile (they are not guaranteed to be zero) before the sum.
    x_f32 = x.astype(jnp.float32)
    if mask_tail:
        lane = lax.broadcasted_iota(jnp.int32, x.shape, x.ndim - 1)
        x_f32 = jnp.where(lane < hw, x_f32, 0.0)
    pooled = jnp.sum(x_f32, axis=-1) * inv_hw        # (Bblk, C) f32
    # TODO(synk): on v7x the pool could be routed through the idle MXU
    # (jnp.dot with a ones vector) to free VALU slots; neutral on v5e/v6e.

    # Excitation: fc1 -> Hardswish -> fc2 -> Hardsigmoid (FLOPs negligible).
    s = jnp.dot(pooled, w1t_ref[...], preferred_element_type=jnp.float32)
    s = _hardswish(s + b1_ref[...])                  # (Bblk, R)
    s = jnp.dot(s, w2t_ref[...], preferred_element_type=jnp.float32)
    s = _hardsigmoid(s + b2_ref[...])                # (Bblk, C)

    # Scale: cast the tiny per-channel gate to x's dtype and multiply in the
    # native dtype (no full-tile up-cast on the store path).
    o_ref[...] = x * s.astype(x.dtype)[:, :, None]


def _vmem_capacity_bytes():
    try:
        return int(pltpu.get_tpu_info().vmem_capacity_bytes)
    except Exception:
        return 64 * 1024 * 1024  # conservative (v7x per-TensorCore)


def prepare_se_params(w1, b1, w2, b2):
    """One-time re-layout of PyTorch-convention nn.Linear params for the kernel.

    w1: (R, C), b1: (R,), w2: (C, R), b2: (C,)  ->  (w1^T, b1[1,R], w2^T, b2[1,C])
    """
    return (w1.T, b1.reshape(1, -1), w2.T, b2.reshape(1, -1))


def se_block(x_nchw, params):
    """SEBlock forward. x_nchw: (B, C, H, W) -> (B, C, H, W)."""
    w1t, b1_2d, w2t, b2_2d = params
    B, C, H, W = x_nchw.shape
    HW = H * W
    R = w1t.shape[1]

    x = x_nchw.reshape(B, C, HW)

    # ---- VMEM sizing (padded tile footprint estimates) --------------------
    itemsize = jnp.dtype(x.dtype).itemsize
    sub = max(8, 32 // itemsize)                   # sublane multiple (f32:8, bf16:16)
    c_pad = pl.cdiv(C, sub) * sub
    hw_pad = pl.cdiv(HW, 128) * 128
    weight_bytes = 4 * (c_pad * R + R + R * c_pad + c_pad) * 2  # resident, x2 buffers

    def slab_bytes(bblk):
        return bblk * c_pad * hw_pad * itemsize

    cap = _vmem_capacity_bytes()
    budget = int(cap * 0.75)

    def fits(bblk):
        # 2x double-buffer x (input slab + output slab) + weights + headroom.
        return 4 * slab_bytes(bblk) + weight_bytes + (2 << 20) <= budget

    candidates = [d for d in range(1, B + 1) if B % d == 0 and fits(d)]
    if not candidates:
        # TODO(synk): two-pass (pool, then scale) kernel chunked over HW for
        # slabs that cannot double-buffer (very large C*HW, esp. on v7x).
        candidates = [1]
    # Prefer the largest block that still leaves >= 2 grid steps (megacore
    # balance on v7x); otherwise take the largest fitting block.
    multi_step = [d for d in candidates if B // d >= 2]
    bblk = max(multi_step) if multi_step else max(candidates)

    vmem_limit = 4 * slab_bytes(bblk) + weight_bytes + (2 << 20)
    vmem_limit = int(min(max(vmem_limit, 16 << 20), int(cap * 0.875)))
    # ------------------------------------------------------------------------

    kernel = functools.partial(
        _se_block_kernel,
        inv_hw=1.0 / HW,
        hw=HW,
        mask_tail=(HW % 128 != 0),
    )

    out = pl.pallas_call(
        kernel,
        out_shape=jax.ShapeDtypeStruct((B, C, HW), x.dtype),
        grid=(B // bblk,),
        in_specs=[
            pl.BlockSpec((bblk, C, HW), lambda b: (b, 0, 0)),  # x: batch slab
            pl.BlockSpec((C, R), lambda b: (0, 0)),            # w1^T (resident)
            pl.BlockSpec((1, R), lambda b: (0, 0)),            # b1
            pl.BlockSpec((R, C), lambda b: (0, 0)),            # w2^T
            pl.BlockSpec((1, C), lambda b: (0, 0)),            # b2
        ],
        out_specs=pl.BlockSpec((bblk, C, HW), lambda b: (b, 0, 0)),
        compiler_params=pltpu.CompilerParams(
            dimension_semantics=("parallel",),
            vmem_limit_bytes=vmem_limit,
        ),
    )(x, w1t, b1_2d, w2t, b2_2d)

    return out.reshape(B, C, H, W)


def init_se_params(key, in_channels, reduct_ratio):
    """Deterministic init mimicking nn.Linear default (uniform +/- 1/sqrt(fan_in))."""
    reduct_ch = int(in_channels * reduct_ratio)
    k1, k2, k3, k4 = jax.random.split(key, 4)
    bound1 = 1.0 / jnp.sqrt(in_channels)
    bound2 = 1.0 / jnp.sqrt(reduct_ch)
    w1 = jax.random.uniform(k1, (reduct_ch, in_channels), jnp.float32, -bound1, bound1)
    b1 = jax.random.uniform(k2, (reduct_ch,), jnp.float32, -bound1, bound1)
    w2 = jax.random.uniform(k3, (in_channels, reduct_ch), jnp.float32, -bound2, bound2)
    b2 = jax.random.uniform(k4, (in_channels,), jnp.float32, -bound2, bound2)
    return w1, b1, w2, b2


def se_block_ref(x, w1, b1, w2, b2):
    """Pure-JAX reference for correctness check (PyTorch-convention weights)."""
    pooled = jnp.mean(x.astype(jnp.float32), axis=(2, 3))   # (B, C)
    s = pooled @ w1.T + b1
    s = _hardswish(s)
    s = s @ w2.T + b2
    s = _hardsigmoid(s)
    return (x.astype(jnp.float32) * s[:, :, None, None]).astype(x.dtype)


def _check(key, B, C, H, W, reduct_ratio):
    kx, kp = jax.random.split(key)
    x = jax.random.normal(kx, (B, C, H, W), jnp.float32)
    w1, b1, w2, b2 = init_se_params(kp, C, reduct_ratio)
    params = prepare_se_params(w1, b1, w2, b2)   # one-time re-layout

    out = jax.block_until_ready(se_block(x, params))
    ref = se_block_ref(x, w1, b1, w2, b2)
    assert out.shape == (B, C, H, W)
    assert jnp.allclose(out, ref, atol=1e-5, rtol=1e-5), \
        f"mismatch vs reference for shape {(B, C, H, W)}"


if __name__ == "__main__":
    key = jax.random.PRNGKey(0)
    k0, k1 = jax.random.split(key)

    # Lane-aligned spatial size (HW = 256): no tail mask path.
    _check(k0, B=2, C=4, H=16, W=16, reduct_ratio=0.5)
    # Non-128-multiple spatial size (HW = 196): exercises the in-kernel tail mask.
    _check(k1, B=2, C=8, H=14, W=14, reduct_ratio=0.5)

    print("KERNEL_OK")
</pallas_src>

<mosaic_0001>
module attributes {stable_mosaic.version = 11 : i64} {
  func.func @_se_block_kernel(%arg0: i32, %arg1: memref<1x4x256xf32, #tpu.memory_space<vmem>>, %arg2: memref<4x2xf32, #tpu.memory_space<vmem>>, %arg3: memref<1x2xf32, #tpu.memory_space<vmem>>, %arg4: memref<2x4xf32, #tpu.memory_space<vmem>>, %arg5: memref<1x4xf32, #tpu.memory_space<vmem>>, %arg6: memref<1x4x256xf32, #tpu.memory_space<vmem>>) attributes {dimension_semantics = [#tpu.dimension_semantics<parallel>], iteration_bounds = array<i64: 2>, scalar_prefetch = 0 : i64, scratch_operands = 0 : i64, tpu.core_type = #tpu.core_type<tc>, window_params = [{transform_indices = @transform_0, window_bounds = array<i64: 1, 4, 256>}, {pipeline_mode = #tpu.pipeline_mode<synchronous>, transform_indices = @transform_1, window_bounds = array<i64: 4, 2>}, {pipeline_mode = #tpu.pipeline_mode<synchronous>, transform_indices = @transform_2, window_bounds = array<i64: 1, 2>}, {pipeline_mode = #tpu.pipeline_mode<synchronous>, transform_indices = @transform_3, window_bounds = array<i64: 2, 4>}, {pipeline_mode = #tpu.pipeline_mode<synchronous>, transform_indices = @transform_4, window_bounds = array<i64: 1, 4>}, {transform_indices = @transform_5, window_bounds = array<i64: 1, 4, 256>}]} {
    %c0 = arith.constant 0 : index
    %c0_0 = arith.constant 0 : index
    %c0_1 = arith.constant 0 : index
    %0 = vector.load %arg1[%c0, %c0_0, %c0_1] : memref<1x4x256xf32, #tpu.memory_space<vmem>>, vector<1x4x256xf32>
    %cst = arith.constant dense<0.000000e+00> : vector<1x4xf32>
    %1 = vector.multi_reduction <add>, %0, %cst [2] : vector<1x4x256xf32> to vector<1x4xf32>
    %cst_2 = arith.constant 3.906250e-03 : f32
    %2 = vector.broadcast %cst_2 : f32 to vector<1x4xf32>
    %3 = arith.mulf %1, %2 : vector<1x4xf32>
    %c0_3 = arith.constant 0 : index
    %c0_4 = arith.constant 0 : index
    %4 = vector.load %arg2[%c0_3, %c0_4] : memref<4x2xf32, #tpu.memory_space<vmem>>, vector<4x2xf32>
    %cst_5 = arith.constant dense<0.000000e+00> : vector<1x2xf32>
    %5 = tpu.matmul %3, %4, %cst_5 {dimension_numbers = #tpu.dot_dimension_numbers<[1], [0], [0], [1], [0, 0, 1, 1], [], []>} : vector<1x4xf32>, vector<4x2xf32>, vector<1x2xf32> -> vector<1x2xf32>
    %c0_6 = arith.constant 0 : index
    %c0_7 = arith.constant 0 : index
    %6 = vector.load %arg3[%c0_6, %c0_7] : memref<1x2xf32, #tpu.memory_space<vmem>>, vector<1x2xf32>
    %7 = arith.addf %5, %6 : vector<1x2xf32>
    %cst_8 = arith.constant 3.000000e+00 : f32
    %8 = vector.broadcast %cst_8 : f32 to vector<1x2xf32>
    %9 = arith.addf %7, %8 : vector<1x2xf32>
    %cst_9 = arith.constant 0.000000e+00 : f32
    %cst_10 = arith.constant 6.000000e+00 : f32
    %10 = vector.broadcast %cst_9 : f32 to vector<1x2xf32>
    %11 = arith.maximumf %10, %9 : vector<1x2xf32>
    %12 = vector.broadcast %cst_10 : f32 to vector<1x2xf32>
    %13 = arith.minimumf %12, %11 : vector<1x2xf32>
    %14 = arith.mulf %7, %13 : vector<1x2xf32>
    %cst_11 = arith.constant 0.166666672 : f32
    %15 = vector.broadcast %cst_11 : f32 to vector<1x2xf32>
    %16 = arith.mulf %14, %15 : vector<1x2xf32>
    %c0_12 = arith.constant 0 : index
    %c0_13 = arith.constant 0 : index
    %17 = vector.load %arg4[%c0_12, %c0_13] : memref<2x4xf32, #tpu.memory_space<vmem>>, vector<2x4xf32>
    %cst_14 = arith.constant dense<0.000000e+00> : vector<1x4xf32>
    %18 = tpu.matmul %16, %17, %cst_14 {dimension_numbers = #tpu.dot_dimension_numbers<[1], [0], [0], [1], [0, 0, 1, 1], [], []>} : vector<1x2xf32>, vector<2x4xf32>, vector<1x4xf32> -> vector<1x4xf32>
    %c0_15 = arith.constant 0 : index
    %c0_16 = arith.constant 0 : index
    %19 = vector.load %arg5[%c0_15, %c0_16] : memref<1x4xf32, #tpu.memory_space<vmem>>, vector<1x4xf32>
    %20 = arith.addf %18, %19 : vector<1x4xf32>
    %cst_17 = arith.constant 3.000000e+00 : f32
    %21 = vector.broadcast %cst_17 : f32 to vector<1x4xf32>
    %22 = arith.addf %20, %21 : vector<1x4xf32>
    %cst_18 = arith.constant 0.000000e+00 : f32
    %cst_19 = arith.constant 6.000000e+00 : f32
    %23 = vector.broadcast %cst_18 : f32 to vector<1x4xf32>
    %24 = arith.maximumf %23, %22 : vector<1x4xf32>
    %25 = vector.broadcast %cst_19 : f32 to vector<1x4xf32>
    %26 = arith.minimumf %25, %24 : vector<1x4xf32>
    %cst_20 = arith.constant 0.166666672 : f32
    %27 = vector.broadcast %cst_20 : f32 to vector<1x4xf32>
    %28 = arith.mulf %26, %27 : vector<1x4xf32>
    %29 = vector.shape_cast %28 : vector<1x4xf32> to vector<1x4x1xf32>
    %30 = vector.broadcast %29 : vector<1x4x1xf32> to vector<1x4x256xf32>
    %31 = arith.mulf %0, %30 : vector<1x4x256xf32>
    %c0_21 = arith.constant 0 : index
    %c0_22 = arith.constant 0 : index
    %c0_23 = arith.constant 0 : index
    %32 = vector.load %arg6[%c0_21, %c0_22, %c0_23] : memref<1x4x256xf32, #tpu.memory_space<vmem>>, vector<1x4x256xf32>
    tpu.vector_store %arg6[%c0_21, %c0_22, %c0_23], %31 {strides = array<i32>} : memref<1x4x256xf32, #tpu.memory_space<vmem>>, vector<1x4x256xf32>,
    return
  }
  func.func @transform_0(%arg0: i32) -> (i32, i32, i32) {
    %c0_i32 = arith.constant 0 : i32
    %c0_i32_0 = arith.constant 0 : i32
    %c0_i32_1 = arith.constant 0 : i32
    return %arg0, %c0_i32, %c0_i32_0 : i32, i32, i32
  }
  func.func @transform_1(%arg0: i32) -> (i32, i32) {
    %c0_i32 = arith.constant 0 : i32
    %c0_i32_0 = arith.constant 0 : i32
    %c0_i32_1 = arith.constant 0 : i32
    return %c0_i32, %c0_i32_0 : i32, i32
  }
  func.func @transform_2(%arg0: i32) -> (i32, i32) {
    %c0_i32 = arith.constant 0 : i32
    %c0_i32_0 = arith.constant 0 : i32
    %c0_i32_1 = arith.constant 0 : i32
    return %c0_i32, %c0_i32_0 : i32, i32
  }
  func.func @transform_3(%arg0: i32) -> (i32, i32) {
    %c0_i32 = arith.constant 0 : i32
    %c0_i32_0 = arith.constant 0 : i32
    %c0_i32_1 = arith.constant 0 : i32
    return %c0_i32, %c0_i32_0 : i32, i32
  }
  func.func @transform_4(%arg0: i32) -> (i32, i32) {
    %c0_i32 = arith.constant 0 : i32
    %c0_i32_0 = arith.constant 0 : i32
    %c0_i32_1 = arith.constant 0 : i32
    return %c0_i32, %c0_i32_0 : i32, i32
  }
  func.func @transform_5(%arg0: i32) -> (i32, i32, i32) {
    %c0_i32 = arith.constant 0 : i32
    %c0_i32_0 = arith.constant 0 : i32
    %c0_i32_1 = arith.constant 0 : i32
    return %arg0, %c0_i32, %c0_i32_0 : i32, i32, i32
  }
}

</mosaic_0001>

<llo_original>
// kernel: tpu_custom_call.1
$region0: #{tpu_custom_call.1}
  #allocation0 [shape = 'u32[]', space=smem, size = 0x4, offset = 0x4, fixed_abs, tag = 'smem constant byte address 0x4 - core index']
  #allocation1 [shape = 'u32[144,128]{1,0:T(1,128)}', space=vmem, size = 0x12000, scoped, tag = 'internal scratch']
  %s0 = inlined_call_operand.hbm [shape: f32[2,4,256], index: 0, kind: input, shape index: {}]
  %s1 = inlined_call_operand.vmem [shape: f32[4,2], index: 1, kind: input, shape index: {}]
  %s2 = inlined_call_operand.vmem [shape: f32[1,2], index: 2, kind: input, shape index: {}]
  %s3 = inlined_call_operand.vmem [shape: f32[2,4], index: 3, kind: input, shape index: {}]
  %s4 = inlined_call_operand.vmem [shape: f32[1,4], index: 4, kind: input, shape index: {}]
  %s5 = inlined_call_operand.hbm [shape: f32[2,4,256], index: 5, kind: output, shape index: {}]
  %s6 = sld [smem:[#allocation0]]
  $region57: #{tpu_custom_call.1} parent=0
    _
  %s8 = ssub.s32 1, %s6
  %s9 = scalar_select 0, %s8, %s6
  $region1: #{tpu_custom_call.1} parent=0
    #allocation2 [shape = 'u8[8192]{0}', space=vmem, size = 0x2000, scoped, tag = 'input window, operand 0']
    #allocation3 [shape = 's32[2]{0}', space=sflag, size = 0x8, scoped, tag = 'scoped memory for tpu_custom_call.1']
    #allocation4 [shape = 's32[2]{0}', space=sflag, size = 0x8, scoped, tag = 'scoped memory for tpu_custom_call.1']
    #allocation5 [shape = 'u8[8192]{0}', space=vmem, size = 0x2000, scoped, tag = 'output window, operand 0']
    %10 = vsyncpa [#allocation3], 0
    %s11 = scalar_lea.sflag [#allocation3], 1
    %12 = vsyncpa %s11, 0
    %13 = vsyncpa [#allocation4], 0
    %s14 = scalar_lea.sflag [#allocation4], 1
    %15 = vsyncpa %s14, 0
    loop: start=0, step=1, limit=4
    $region2: #{tpu_custom_call.1} parent=1 // loop_pre_header
      _
    $region3: #{tpu_custom_call.1} parent=1 // loop_header
      %s17 = sphi 0, %s21
      %p18 = scmp.ge.s32.totalorder %s17, 4
      %s27 = sphi 0, %s29
      %s30 = sphi 0, %s27
      %s31 = sphi 0, %s30
      %s47 = sphi 0, %s31
      %s51 = sphi 0, %s51
      %s53 = sphi 0, %s51
      %s54 = sphi 0, %s53
      %s68 = sphi 0, %s54
      %s72 = sphi 0, %s72
      %s74 = sphi 0, %s72
      %s75 = sphi 0, %s74
      %s89 = sphi 0, %s75
      %s93 = sphi 0, %s93
      %s95 = sphi 0, %s93
      %s96 = sphi 0, %s95
      %s110 = sphi 0, %s96
      %s114 = sphi 0, %s114
      %s116 = sphi 0, %s114
      %s117 = sphi 0, %s116
      %s131 = sphi 0, %s117
      %s137 = sphi 0, %s139
      %s140 = sphi 0, %s137
      %s141 = sphi 0, %s140
      %s157 = sphi 0, %s141
    $region4: #{tpu_custom_call.1} parent=1 // loop_header_branch
      %20 = sbr.rel (%p18) target = $region8
    $region5: #{tpu_custom_call.1} parent=1 // loop_body
      %s22 = ssub.s32 %s17, 1
      %s23 = ssub.s32 %s17, 2
      %s24 = sadd.s32 %s17, 1
      %s25 = ssub.s32 %s17, %s24
      %p26 = scmp.eq.s32.totalorder %s25, 0
      %s28 = sadd.s32 %s27, 1
      %s29 = scalar_select %p26, %s27, %s28
      %p32 = pneg %p26
      %p33 = scmp.eq.s32.totalorder %s17, 1
      %p34 = por %p32, %p33
      %p35 = scmp.ne.s32.totalorder %s27, %s30
      %p36 = scmp.eq.s32.totalorder %s17, 0
      %p37 = por %p35, %p36
      %p38 = scmp.ne.s32.totalorder %s27, %s30
      %p39 = scmp.eq.s32.totalorder %s22, 1
      %p40 = por %p38, %p39
      %p41 = scmp.ne.s32.totalorder %s30, %s31
      %p42 = scmp.eq.s32.totalorder %s22, 0
      %p43 = por %p41, %p42
      %p44 = scmp.ne.s32.totalorder %s30, %s31
      %p45 = scmp.eq.s32.totalorder %s23, 1
      %p46 = por %p44, %p45
      %p48 = scmp.ne.s32.totalorder %s31, %s47
      %p49 = scmp.eq.s32.totalorder %s23, 0
      %p50 = por %p48, %p49
      %s52 = sadd.s32 %s51, 1
      %p55 = scmp.eq.s32.totalorder %s17, 1
      %p56 = scmp.ne.s32.totalorder %s51, %s53
      %p57 = scmp.eq.s32.totalorder %s17, 0
      %p58 = por %p56, %p57
      %p59 = scmp.ne.s32.totalorder %s51, %s53
      %p60 = scmp.eq.s32.totalorder %s22, 1
      %p61 = por %p59, %p60
      %p62 = scmp.ne.s32.totalorder %s53, %s54
      %p63 = scmp.eq.s32.totalorder %s22, 0
      %p64 = por %p62, %p63
      %p65 = scmp.ne.s32.totalorder %s53, %s54
      %p66 = scmp.eq.s32.totalorder %s23, 1
      %p67 = por %p65, %p66
      %p69 = scmp.ne.s32.totalorder %s54, %s68
      %p70 = scmp.eq.s32.totalorder %s23, 0
      %p71 = por %p69, %p70
      %s73 = sadd.s32 %s72, 1
      %p76 = scmp.eq.s32.totalorder %s17, 1
      %p77 = scmp.ne.s32.totalorder %s72, %s74
      %p78 = scmp.eq.s32.totalorder %s17, 0
      %p79 = por %p77, %p78
      %p80 = scmp.ne.s32.totalorder %s72, %s74
      %p81 = scmp.eq.s32.totalorder %s22, 1
      %p82 = por %p80, %p81
      %p83 = scmp.ne.s32.totalorder %s74, %s75
      %p84 = scmp.eq.s32.totalorder %s22, 0
      %p85 = por %p83, %p84
      %p86 = scmp.ne.s32.totalorder %s74, %s75
      %p87 = scmp.eq.s32.totalorder %s23, 1
      %p88 = por %p86, %p87
      %p90 = scmp.ne.s32.totalorder %s75, %s89
      %p91 = scmp.eq.s32.totalorder %s23, 0
      %p92 = por %p90, %p91
      %s94 = sadd.s32 %s93, 1
      %p97 = scmp.eq.s32.totalorder %s17, 1
      %p98 = scmp.ne.s32.totalorder %s93, %s95
      %p99 = scmp.eq.s32.totalorder %s17, 0
      %p100 = por %p98, %p99
      %p101 = scmp.ne.s32.totalorder %s93, %s95
      %p102 = scmp.eq.s32.totalorder %s22, 1
      %p103 = por %p101, %p102
      %p104 = scmp.ne.s32.totalorder %s95, %s96
      %p105 = scmp.eq.s32.totalorder %s22, 0
      %p106 = por %p104, %p105
      %p107 = scmp.ne.s32.totalorder %s95, %s96
      %p108 = scmp.eq.s32.totalorder %s23, 1
      %p109 = por %p107, %p108
      %p111 = scmp.ne.s32.totalorder %s96, %s110
      %p112 = scmp.eq.s32.totalorder %s23, 0
      %p113 = por %p111, %p112
      %s115 = sadd.s32 %s114, 1
      %p118 = scmp.eq.s32.totalorder %s17, 1
      %p119 = scmp.ne.s32.totalorder %s114, %s116
      %p120 = scmp.eq.s32.totalorder %s17, 0
      %p121 = por %p119, %p120
      %p122 = scmp.ne.s32.totalorder %s114, %s116
      %p123 = scmp.eq.s32.totalorder %s22, 1
      %p124 = por %p122, %p123
      %p125 = scmp.ne.s32.totalorder %s116, %s117
      %p126 = scmp.eq.s32.totalorder %s22, 0
      %p127 = por %p125, %p126
      %p128 = scmp.ne.s32.totalorder %s116, %s117
      %p129 = scmp.eq.s32.totalorder %s23, 1
      %p130 = por %p128, %p129
      %p132 = scmp.ne.s32.totalorder %s117, %s131
      %p133 = scmp.eq.s32.totalorder %s23, 0
      %p134 = por %p132, %p133
      %s135 = ssub.s32 %s17, %s24
      %p136 = scmp.eq.s32.totalorder %s135, 0
      %s138 = sadd.s32 %s137, 1
      %s139 = scalar_select %p136, %s137, %s138
      %p142 = pneg %p136
      %p143 = scmp.eq.s32.totalorder %s17, 1
      %p144 = por %p142, %p143
      %p145 = scmp.ne.s32.totalorder %s137, %s140
      %p146 = scmp.eq.s32.totalorder %s17, 0
      %p147 = por %p145, %p146
      %p148 = scmp.ne.s32.totalorder %s137, %s140
      %p149 = scmp.eq.s32.totalorder %s22, 1
      %p150 = por %p148, %p149
      %p151 = scmp.ne.s32.totalorder %s140, %s141
      %p152 = scmp.eq.s32.totalorder %s22, 0
      %p153 = por %p151, %p152
      %p154 = scmp.ne.s32.totalorder %s140, %s141
      %p155 = scmp.eq.s32.totalorder %s23, 1
      %p156 = por %p154, %p155
      %p158 = scmp.ne.s32.totalorder %s141, %s157
      %p159 = scmp.eq.s32.totalorder %s23, 0
      %p160 = por %p158, %p159
      %p161 = scmp.le.s32.totalorder 1, %s17
      %p162 = scmp.lt.s32.totalorder %s17, 3
      %p163 = pnand %p161, %p162
      %p164 = pneg %p163
      // Predicated region
      $region9: #{tpu_custom_call.1} parent=5 // pred_check
        _
      $region10: #{tpu_custom_call.1} parent=5 // pred_check_branch
        %166 = sbr.rel (%p163) target = $region12
      $region11: #{tpu_custom_call.1} parent=5 // pred_region
        %s167 = ssub.s32 %s17, 1
        // Predicated region
        $region13: #{tpu_custom_call.1} parent=11 // pred_check
          %p168 = pneg %p64
        $region14: #{tpu_custom_call.1} parent=11 // pred_check_branch
          %170 = sbr.rel (%p168) target = $region16
        $region15: #{tpu_custom_call.1} parent=11 // pred_region
          _
        $region16: #{tpu_custom_call.1} parent=11 // pred_fallthru
          _
        // Predicated region
        $region17: #{tpu_custom_call.1} parent=11 // pred_check
          %p171 = pneg %p85
        $region18: #{tpu_custom_call.1} parent=11 // pred_check_branch
          %173 = sbr.rel (%p171) target = $region20
        $region19: #{tpu_custom_call.1} parent=11 // pred_region
          _
        $region20: #{tpu_custom_call.1} parent=11 // pred_fallthru
          _
        // Predicated region
        $region21: #{tpu_custom_call.1} parent=11 // pred_check
          %p174 = pneg %p106
        $region22: #{tpu_custom_call.1} parent=11 // pred_check_branch
          %176 = sbr.rel (%p174) target = $region24
        $region23: #{tpu_custom_call.1} parent=11 // pred_region
          _
        $region24: #{tpu_custom_call.1} parent=11 // pred_fallthru
          _
        // Predicated region
        $region25: #{tpu_custom_call.1} parent=11 // pred_check
          %p177 = pneg %p127
        $region26: #{tpu_custom_call.1} parent=11 // pred_check_branch
          %179 = sbr.rel (%p177) target = $region28
        $region27: #{tpu_custom_call.1} parent=11 // pred_region
          _
        $region28: #{tpu_custom_call.1} parent=11 // pred_fallthru
          _
      $region12: #{tpu_custom_call.1} parent=5 // pred_fallthru
        _
      %p180 = scmp.lt.s32.totalorder %s17, 2
      // Predicated region
      $region29: #{tpu_custom_call.1} parent=5 // pred_check
        %p181 = pneg %p180
      $region30: #{tpu_custom_call.1} parent=5 // pred_check_branch
        %183 = sbr.rel (%p181) target = $region32
      $region31: #{tpu_custom_call.1} parent=5 // pred_region
        // Predicated region
        $region33: #{tpu_custom_call.1} parent=31 // pred_check
          %p184 = pneg %p37
        $region34: #{tpu_custom_call.1} parent=31 // pred_check_branch
          %186 = sbr.rel (%p184) target = $region36
        $region35: #{tpu_custom_call.1} parent=31 // pred_region
          %s187 = sand.u32 %s27, 1
          %s188 = scalar_lea.sflag [#allocation3], %s187
          %s189 = sand.u32 %s27, 1
          %s190 = smul.addr %s189, 8
          %s191 = scalar_lea.vmem [#allocation2], %s190
          %s193 = ssub.s32 128, 128
          %194 = vsyncadd %s188, %s193
          %s195 = smul.addr %s17, 2
          %s196 = smul.addr %s195, 64
          %s197 = scalar_lea.hbm %s0, %s196
          %s199 = sshll.u32 %s191, 4
          %s200 = int_to_ptr.vmem [resolvable:$true] %s199
          %202 = dma.hbm_to_vmem [thread:$0]  %s197, 128, %s200, %s188
        $region36: #{tpu_custom_call.1} parent=31 // pred_fallthru
          _
      $region32: #{tpu_custom_call.1} parent=5 // pred_fallthru
        _
      %p203 = scmp.le.s32.totalorder 1, %s17
      %p204 = scmp.lt.s32.totalorder %s17, 3
      %p205 = pnand %p203, %p204
      %p206 = pneg %p205
      // Predicated region
      $region37: #{tpu_custom_call.1} parent=5 // pred_check
        _
      $region38: #{tpu_custom_call.1} parent=5 // pred_check_branch
        %208 = sbr.rel (%p205) target = $region40
      $region39: #{tpu_custom_call.1} parent=5 // pred_region
        %s209 = ssub.s32 %s17, 1
        %s210 = sand.u32 %s30, 1
        %s211 = scalar_lea.sflag [#allocation3], %s210
        %s212 = sand.u32 %s30, 1
        %s213 = smul.addr %s212, 8
        %s214 = scalar_lea.vmem [#allocation2], %s213
        // Predicated region
        $region41: #{tpu_custom_call.1} parent=39 // pred_check
          %p215 = pneg %p43
        $region42: #{tpu_custom_call.1} parent=39 // pred_check_branch
          %217 = sbr.rel (%p215) target = $region44
        $region43: #{tpu_custom_call.1} parent=39 // pred_region
          %218 = dma.done %s211, 128
        $region44: #{tpu_custom_call.1} parent=39 // pred_fallthru
          _
        %s219 = sand.u32 %s30, 1
        %s220 = scalar_lea.sflag [#allocation3], %s219
        %s221 = sand.u32 %s30, 1
        %s222 = smul.addr %s221, 8
        %s223 = scalar_lea.vmem [#allocation2], %s222
        %p224 = pneg %p43
        %p225 = pneg %p40
        %p226 = pneg %p64
        %p227 = pneg %p61
        %p228 = pneg %p85
        %p229 = pneg %p82
        %p230 = pneg %p106
        %p231 = pneg %p103
        %p232 = pneg %p127
        %p233 = pneg %p124
        %p234 = pneg %p153
        %p235 = pneg %p150
        %s236 = sand.u32 %s140, 1
        %s237 = scalar_lea.sflag [#allocation4], %s236
        %s238 = sand.u32 %s140, 1
        %s239 = smul.addr %s238, 8
        %s240 = scalar_lea.vmem [#allocation5], %s239
        %v241 = vld [vmem:[%s214] sm:$0xff]
        %v243 = vcombine.high %v241, %v241
        %vm245 = vcmask 1043456
        %v246 = vsel %vm245, %v241, 0.0
        %v247 = vsel %vm245, %v243, 0.0
        %v248 = vadd.f32 %v246, %v247
        %249 = vadd.xlane.f32.xlu0 %v248
        %v250 = vpop.xlane.xlu0 %249
        %v251 = vmul.f32 %v250, 0.00390625
        %v252 = vld [vmem:[%s1] sm:$0xf]
        %v253 = vld [vmem:[%s2] sm:$0x1]
        %v255 = vlaneseq
        %v256 = vand.u32 %v255, 127
        %v257 = vlaneseq
        %v258 = vshrl.u32 %v257, 7
        %v259 = vsub.s32 %v256, %v258
        %v260 = vrot.slane %v251, %v259
        %vm261 = vcmask 31744
        %v262 = vsel %vm261, %v260, 0
        %v265 = vsel %vm245, %v252, 0
        %267 = vmatprep.subr.mxu0 0.0
        %268 = vmatpush1.msra.mxu0 %v265
        %269 = vmatprep.subr.mxu0 0.0
        %270 = vmatpush1.msra.mxu0 0.0
        %271 = vmatprep.subr.mxu0 0.0
        %272 = vmatpush1.msra.mxu0 0.0
        %273 = vmatprep.subr.mxu0 0.0
        %274 = vmatpush1.msra.mxu0 0.0
        %275 = vmatprep.subr.mxu0 0.0
        %276 = vmatpush1.msra.mxu0 0.0
        %277 = vmatprep.subr.mxu0 0.0
        %278 = vmatpush1.msra.mxu0 0.0
        %279 = vmatprep.subr.mxu0 0.0
        %280 = vmatpush1.msra.mxu0 0.0
        %281 = vmatprep.subr.mxu0 0.0
        %282 = vmatpush1.msra.mxu0 0.0
        %283 = vmatprep.subr.mxu0 0.0
        %284 = vmatpush1.msra.mxu0 0.0
        %285 = vmatprep.subr.mxu0 0.0
        %286 = vmatpush1.msra.mxu0 0.0
        %287 = vmatprep.subr.mxu0 0.0
        %288 = vmatpush1.msra.mxu0 0.0
        %289 = vmatprep.subr.mxu0 0.0
        %290 = vmatpush1.msra.mxu0 0.0
        %291 = vmatprep.subr.mxu0 0.0
        %292 = vmatpush1.msra.mxu0 0.0
        %293 = vmatprep.subr.mxu0 0.0
        %294 = vmatpush1.msra.mxu0 0.0
        %295 = vmatprep.subr.mxu0 0.0
        %296 = vmatpush1.msra.mxu0 0.0
        %297 = vmatprep.subr.mxu0 0.0
        %298 = vmatpush1.msra.mxu0 0.0
        %299 = vmatprep.subr.mxu0 0.0
        %300 = vmatpush1.msra.mxu0 0.0
        %301 = vmatprep.subr.mxu0 0.0
        %302 = vmatpush1.msra.mxu0 0.0
        %303 = vmatprep.subr.mxu0 0.0
        %304 = vmatpush1.msra.mxu0 0.0
        %305 = vmatprep.subr.mxu0 0.0
        %306 = vmatpush1.msra.mxu0 0.0
        %307 = vmatprep.subr.mxu0 0.0
        %308 = vmatpush1.msra.mxu0 0.0
        %309 = vmatprep.subr.mxu0 0.0
        %310 = vmatpush1.msra.mxu0 0.0
        %311 = vmatprep.subr.mxu0 0.0
        %312 = vmatpush1.msra.mxu0 0.0
        %313 = vmatprep.subr.mxu0 0.0
        %314 = vmatpush1.msra.mxu0 0.0
        %315 = vmatprep.subr.mxu0 0.0
        %316 = vmatpush1.msra.mxu0 0.0
        %317 = vmatprep.subr.mxu0 0.0
        %318 = vmatpush1.msra.mxu0 0.0
        %319 = vmatprep.subr.mxu0 0.0
        %320 = vmatpush1.msra.mxu0 0.0
        %321 = vmatprep.subr.mxu0 0.0
        %322 = vmatpush1.msra.mxu0 0.0
        %323 = vmatprep.subr.mxu0 0.0
        %324 = vmatpush1.msra.mxu0 0.0
        %325 = vmatprep.subr.mxu0 0.0
        %326 = vmatpush1.msra.mxu0 0.0
        %327 = vmatprep.subr.mxu0 0.0
        %328 = vmatpush1.msra.mxu0 0.0
        %329 = vmatprep.subr.mxu0 0.0
        %330 = vmatpush1.msra.mxu0 0.0
        %331 = vmatprep.mubr.f32.mxu0 0.0
        %332 = vmatmul.mubr.f32.gmra.mrb[0].mxu0 %v262
        %v333 = vpop.f32.mrb[0].mxu0
        %v334 = vadd.f32 %v253, %v333
        %v335 = vpop.f32.mrb[0].mxu0
        %336 = vdwg.mxu0
        %v337 = vadd.f32 %v334, 3.0
        %v338 = vmax.f32 %v337, 0.0
        %v339 = vmin.f32 %v338, 6.0
        %v340 = vmul.f32 %v334, %v339
        %v341 = vmul.f32 %v340, 0.16666667
        %v342 = vld [vmem:[%s3] sm:$0x3]
        %v343 = vld [vmem:[%s4] sm:$0x1]
        %vm344 = vcmask 15360
        %v346 = vsel %vm344, %v341, 0
        %vm348 = vcmask 1041408
        %v350 = vsel %vm348, %v342, 0
        %352 = vmatprep.subr.mxu0 0.0
        %353 = vmatpush1.msra.mxu0 %v350
        %354 = vmatprep.subr.mxu0 0.0
        %355 = vmatpush1.msra.mxu0 0.0
        %356 = vmatprep.subr.mxu0 0.0
        %357 = vmatpush1.msra.mxu0 0.0
        %358 = vmatprep.subr.mxu0 0.0
        %359 = vmatpush1.msra.mxu0 0.0
        %360 = vmatprep.subr.mxu0 0.0
        %361 = vmatpush1.msra.mxu0 0.0
        %362 = vmatprep.subr.mxu0 0.0
        %363 = vmatpush1.msra.mxu0 0.0
        %364 = vmatprep.subr.mxu0 0.0
        %365 = vmatpush1.msra.mxu0 0.0
        %366 = vmatprep.subr.mxu0 0.0
        %367 = vmatpush1.msra.mxu0 0.0
        %368 = vmatprep.subr.mxu0 0.0
        %369 = vmatpush1.msra.mxu0 0.0
        %370 = vmatprep.subr.mxu0 0.0
        %371 = vmatpush1.msra.mxu0 0.0
        %372 = vmatprep.subr.mxu0 0.0
        %373 = vmatpush1.msra.mxu0 0.0
        %374 = vmatprep.subr.mxu0 0.0
        %375 = vmatpush1.msra.mxu0 0.0
        %376 = vmatprep.subr.mxu0 0.0
        %377 = vmatpush1.msra.mxu0 0.0
        %378 = vmatprep.subr.mxu0 0.0
        %379 = vmatpush1.msra.mxu0 0.0
        %380 = vmatprep.subr.mxu0 0.0
        %381 = vmatpush1.msra.mxu0 0.0
        %382 = vmatprep.subr.mxu0 0.0
        %383 = vmatpush1.msra.mxu0 0.0
        %384 = vmatprep.subr.mxu0 0.0
        %385 = vmatpush1.msra.mxu0 0.0
        %386 = vmatprep.subr.mxu0 0.0
        %387 = vmatpush1.msra.mxu0 0.0
        %388 = vmatprep.subr.mxu0 0.0
        %389 = vmatpush1.msra.mxu0 0.0
        %390 = vmatprep.subr.mxu0 0.0
        %391 = vmatpush1.msra.mxu0 0.0
        %392 = vmatprep.subr.mxu0 0.0
        %393 = vmatpush1.msra.mxu0 0.0
        %394 = vmatprep.subr.mxu0 0.0
        %395 = vmatpush1.msra.mxu0 0.0
        %396 = vmatprep.subr.mxu0 0.0
        %397 = vmatpush1.msra.mxu0 0.0
        %398 = vmatprep.subr.mxu0 0.0
        %399 = vmatpush1.msra.mxu0 0.0
        %400 = vmatprep.subr.mxu0 0.0
        %401 = vmatpush1.msra.mxu0 0.0
        %402 = vmatprep.subr.mxu0 0.0
        %403 = vmatpush1.msra.mxu0 0.0
        %404 = vmatprep.subr.mxu0 0.0
        %405 = vmatpush1.msra.mxu0 0.0
        %406 = vmatprep.subr.mxu0 0.0
        %407 = vmatpush1.msra.mxu0 0.0
        %408 = vmatprep.subr.mxu0 0.0
        %409 = vmatpush1.msra.mxu0 0.0
        %410 = vmatprep.subr.mxu0 0.0
        %411 = vmatpush1.msra.mxu0 0.0
        %412 = vmatprep.subr.mxu0 0.0
        %413 = vmatpush1.msra.mxu0 0.0
        %414 = vmatprep.subr.mxu0 0.0
        %415 = vmatpush1.msra.mxu0 0.0
        %416 = vmatprep.mubr.f32.mxu0 0.0
        %417 = vmatmul.mubr.f32.gmra.mrb[0].mxu0 %v346
        %v418 = vpop.f32.mrb[0].mxu0
        %v419 = vadd.f32 %v343, %v418
        %v420 = vpop.f32.mrb[0].mxu0
        %421 = vdwg.mxu0
        %v422 = vadd.f32 %v419, 3.0
        %v423 = vmax.f32 %v422, 0.0
        %v424 = vmin.f32 %v423, 6.0
        %v425 = vmul.f32 %v424, 0.16666667
        %v426 = vlaneseq
        %v427 = vshrl.u32 %v426, 7
        %v428 = vsub.s32 0, %v427
        %v429 = vrot.slane %v425, %v428
        %431 = vbcast.lane.b32.xlu0 %v429, 256
        %v432 = vpop.permute.xlu0 %431
        %v435 = vunpack.c.l.s4 839922192
        %v436 = vunpack.c.0.s8 %v435
        %v437 = vlaneseq
        %v438 = vshrl.u32 %v437, 7
        %v439 = vsub.s32 %v436, %v438
        %v440 = vrot.slane %v432, %v439
        %v442 = vmul.f32 %v241, %v440
        %443 = vst [vmem:[%s240] sm:$0xff] %v442
        %s444 = sand.u32 %s140, 1
        %s445 = scalar_lea.sflag [#allocation4], %s444
        %s446 = sand.u32 %s140, 1
        %s447 = smul.addr %s446, 8
        %s448 = scalar_lea.vmem [#allocation5], %s447
        // Predicated region
        $region45: #{tpu_custom_call.1} parent=39 // pred_check
          %p449 = pneg %p150
        $region46: #{tpu_custom_call.1} parent=39 // pred_check_branch
          %451 = sbr.rel (%p449) target = $region48
        $region47: #{tpu_custom_call.1} parent=39 // pred_region
          %s453 = ssub.s32 128, 128
          %454 = vsyncadd %s445, %s453
          %s455 = smul.addr %s22, 2
          %s456 = smul.addr %s455, 64
          %s457 = scalar_lea.hbm %s5, %s456
          %s459 = sshll.u32 %s448, 4
          %s460 = int_to_ptr.vmem [resolvable:$true] %s459
          %462 = dma.vmem_to_hbm [thread:$0]  %s460, 128, %s457, %s445
        $region48: #{tpu_custom_call.1} parent=39 // pred_fallthru
          _
      $region40: #{tpu_custom_call.1} parent=5 // pred_fallthru
        _
      %p463 = scmp.le.s32.totalorder 2, %s17
      // Predicated region
      $region49: #{tpu_custom_call.1} parent=5 // pred_check
        %p464 = pneg %p463
      $region50: #{tpu_custom_call.1} parent=5 // pred_check_branch
        %466 = sbr.rel (%p464) target = $region52
      $region51: #{tpu_custom_call.1} parent=5 // pred_region
        %s467 = ssub.s32 %s17, 2
        // Predicated region
        $region53: #{tpu_custom_call.1} parent=51 // pred_check
          %p468 = pneg %p156
        $region54: #{tpu_custom_call.1} parent=51 // pred_check_branch
          %470 = sbr.rel (%p468) target = $region56
        $region55: #{tpu_custom_call.1} parent=51 // pred_region
          %s471 = sand.u32 %s141, 1
          %s472 = scalar_lea.sflag [#allocation4], %s471
          %s473 = sand.u32 %s141, 1
          %s474 = smul.addr %s473, 8
          %s475 = scalar_lea.vmem [#allocation5], %s474
          %476 = dma.done %s472, 128
        $region56: #{tpu_custom_call.1} parent=51 // pred_fallthru
          _
      $region52: #{tpu_custom_call.1} parent=5 // pred_fallthru
        _
    $region6: #{tpu_custom_call.1} parent=1 // loop_footer
      %s21 = sadd.s32 1, %s17
    $region7: #{tpu_custom_call.1} parent=1 // loop_footer_branch
      %16 = sbr.rel target = $region3
    $region8: #{tpu_custom_call.1} parent=1 // loop_exit
      _
    %477 = vsyncpa [#allocation3], 1
    %s478 = scalar_lea.sflag [#allocation3], 1
    %479 = vsyncpa %s478, 1
    %480 = vsyncpa [#allocation4], 1
    %s481 = scalar_lea.sflag [#allocation4], 1
    %482 = vsyncpa %s481, 1

</llo_original>
